<compile_context>
chip_gen: v6e
topology: v6e:2x2x1
jax: 0.10.0
libtpu: 0.0.40
codegen_flags: <defaults>
</compile_context>

<pallas_src>
import math

import jax
import jax.numpy as jnp
from jax import lax
from jax.experimental import pallas as pl
from jax.experimental.pallas import tpu as pltpu


def _round_up(x, m):
    return (x + m - 1) // m * m


# --------------------------------------------------------------------------
# Kernel 1: fused table F = E @ W.T, tiled over vocab rows (one-shot op).
# --------------------------------------------------------------------------
def _fuse_table_kernel(e_ref, w_ref, f_ref):
    f_ref[...] = jnp.dot(
        e_ref[...],
        w_ref[...],
        preferred_element_type=jnp.float32,
        precision=lax.Precision.HIGHEST,   # one-shot: exact f32, cast once below
    ).astype(f_ref.dtype)


# --------------------------------------------------------------------------
# Kernel 2: tiled one-hot gather from the VMEM-resident fused table.
# --------------------------------------------------------------------------
def _gather_kernel(idx_ref, f_ref, o_ref):
    # idx_ref : (1, 1, TM) int32 row indices for this tile (lane-dense)
    # f_ref   : (V_pad, BD_pad) fused table, whole-array resident in VMEM
    # o_ref   : (TM, BD_pad) f32 output tile (lane-dense, BD_pad % 128 == 0)
    tm = idx_ref.shape[-1]
    v = f_ref.shape[0]
    idx = idx_ref[0]  # (1, TM)
    # Transposed one-hot (V, TM): onehot_t[r, t] = (r == idx[t]).  Built directly
    # from the lane-dense index row, no relayout needed.
    # NOTE(v5e): the bf16 cast of the one-hot costs VPU pack ops on v5e (no bf16
    # VALU); if VALU ever binds there, keep the one-hot f32 and only the table bf16.
    onehot_t = (
        lax.broadcasted_iota(jnp.int32, (v, tm), 0) == idx
    ).astype(f_ref.dtype)
    # out[t, d] = sum_r onehot_t[r, t] * F[r, d]  (MXU, f32 accumulation; the
    # selection is exact since the one-hot is exactly 0/1 in bf16).
    o_ref[...] = lax.dot_general(
        onehot_t,
        f_ref[...],
        dimension_numbers=(((0,), (0,)), ((), ())),
        preferred_element_type=jnp.float32,
    ).astype(o_ref.dtype)


# --------------------------------------------------------------------------
# Wrapper
# --------------------------------------------------------------------------
def pr_embedding_bag(
    indices,
    emb_weight,
    proj_weight=None,
    *,
    tm=1024,
    table_dtype=jnp.bfloat16,
):
    """Forward pass of PrEmbeddingBag.

    indices     : integer array, any shape
    emb_weight  : (num_embeddings, proj_dim) f32
    proj_weight : (base_dim, proj_dim) f32 (PyTorch nn.Linear layout), or
                  None for the Identity path (proj_dim == base_dim)
    table_dtype : storage dtype of the fused table (bf16 by default -- an
                  explicit perf/numerics tradeoff; pass jnp.float32 to opt out)
    returns     : indices.shape + (base_dim,) f32
    """
    num_emb, proj_dim = emb_weight.shape
    if proj_weight is None:
        base_dim = proj_dim  # nn.Identity path
    else:
        base_dim, pw_in = proj_weight.shape
        assert pw_in == proj_dim, (proj_weight.shape, emb_weight.shape)

    v_pad = _round_up(num_emb, 128)     # padded vocab rows (zero rows are inert)
    bd_pad = _round_up(base_dim, 128)   # lane-dense output columns
    elt = jnp.dtype(table_dtype).itemsize
    table_bytes = v_pad * bd_pad * elt

    # Generation-aware VMEM budget (v7x ~56 MiB, v5e/v6e ~112 MiB usable).
    try:
        vmem_cap = int(pltpu.get_tpu_info().vmem_capacity_bytes)
    except Exception:  # conservative fallback if the query is unavailable
        vmem_cap = 64 << 20
    headroom = max(8 << 20, vmem_cap // 8)
    vmem_budget = vmem_cap - headroom

    orig_shape = indices.shape
    flat_idx = indices.reshape(-1).astype(jnp.int32)
    n = flat_idx.shape[0]

    # Large-vocab fallback: fused table would not stay VMEM-resident.
    # TODO(synk): replace with the HBM-resident manual DMA row-gather kernel.
    if table_bytes + (8 << 20) > vmem_budget:
        gathered = jnp.take(emb_weight.astype(jnp.float32), flat_idx, axis=0)
        out = gathered if proj_weight is None else gathered @ proj_weight.T.astype(jnp.float32)
        return out.reshape(orig_shape + (base_dim,))

    # ---- Step 1: fused table F = E @ W.T (or padded E for the Identity path) ----
    if proj_weight is None:
        f_pad = (
            jnp.zeros((v_pad, bd_pad), table_dtype)
            .at[:num_emb, :base_dim]
            .set(emb_weight.astype(table_dtype))
        )
    else:
        k_pad = _round_up(proj_dim, 128)  # free K padding, fills MXU depth
        e_pad = (
            jnp.zeros((v_pad, k_pad), jnp.float32)
            .at[:num_emb, :proj_dim]
            .set(emb_weight.astype(jnp.float32))
        )
        w_t = (
            jnp.zeros((k_pad, bd_pad), jnp.float32)
            .at[:proj_dim, :base_dim]
            .set(proj_weight.T.astype(jnp.float32))
        )
        block_v = next(b for b in (1024, 512, 256, 128) if v_pad % b == 0)
        f_pad = pl.pallas_call(
            _fuse_table_kernel,
            out_shape=jax.ShapeDtypeStruct((v_pad, bd_pad), table_dtype),
            grid=(v_pad // block_v,),
            in_specs=[
                pl.BlockSpec((block_v, k_pad), lambda i: (i, 0)),
                pl.BlockSpec((k_pad, bd_pad), lambda i: (0, 0)),
            ],
            out_specs=pl.BlockSpec((block_v, bd_pad), lambda i: (i, 0)),
            compiler_params=pltpu.CompilerParams(
                dimension_semantics=("parallel",),
            ),
        )(e_pad, w_t)

    # ---- Step 2: tiled one-hot gather from the fused table ----
    # Per-step working set: one-hot (i32 iota + bf16 copy) + 2 output buffers
    # + 2 index buffers (sublane-padded to 8 rows).
    def _step_bytes(t):
        return t * v_pad * (4 + elt) + 2 * t * bd_pad * 4 + 2 * 8 * t * 4

    # Big tile for throughput; clamp for tiny N and for the VMEM working set.
    tm = max(8, min(_round_up(tm, 8), _round_up(n, 8)))
    while tm > 8 and table_bytes + _step_bytes(tm) > vmem_budget:
        tm = max(8, _round_up(tm // 2, 8))

    n_pad = _round_up(n, tm)
    n_tiles = n_pad // tm
    # v7x megacore: make sure the "parallel" grid axis has >= 2 tiles so both
    # TensorCores get work (instead of one running a single tile alone).
    if n_tiles == 1 and tm >= 16:
        tm = _round_up(tm // 2, 8)
        n_pad = _round_up(n, tm)
        n_tiles = n_pad // tm

    # Lane-dense index layout: (n_tiles, 1, TM), delivered as (1, 1, TM) blocks.
    idx3d = (
        jnp.zeros((n_pad,), jnp.int32)
        .at[:n]
        .set(flat_idx)
        .reshape(n_tiles, 1, tm)
    )

    vmem_limit = int(
        min(max(table_bytes + _step_bytes(tm) + (4 << 20), 32 << 20), vmem_budget)
    )

    cost = pl.CostEstimate(
        flops=2 * n_pad * v_pad * bd_pad,
        transcendentals=0,
        bytes_accessed=table_bytes + n_pad * 4 + n_pad * bd_pad * 4,
    )

    out = pl.pallas_call(
        _gather_kernel,
        out_shape=jax.ShapeDtypeStruct((n_pad, bd_pad), jnp.float32),
        grid=(n_tiles,),
        in_specs=[
            # Per-tile lane-dense index row.
            pl.BlockSpec((1, 1, tm), lambda i: (i, 0, 0)),
            # Fused table: whole array resident in VMEM, single copy
            # (no double buffering for a block that never changes).
            pl.BlockSpec(memory_space=pltpu.MemorySpace.VMEM),
        ],
        out_specs=pl.BlockSpec((tm, bd_pad), lambda i: (i, 0)),
        compiler_params=pltpu.CompilerParams(
            dimension_semantics=("parallel",),
            vmem_limit_bytes=vmem_limit,
        ),
        cost_estimate=cost,
    )(idx3d, f_pad)

    return out[:n, :base_dim].reshape(orig_shape + (base_dim,))


def _xavier_uniform(key, shape):
    fan_out, fan_in = shape[0], shape[1]
    bound = math.sqrt(6.0 / (fan_in + fan_out))
    return jax.random.uniform(key, shape, jnp.float32, -bound, bound)


if __name__ == "__main__":
    num_embeddings = 50
    proj_embedding_dim = 64
    base_dim = 128

    key = jax.random.PRNGKey(0)
    k_emb, k_proj, k_idx = jax.random.split(key, 3)

    # Deterministic parameter init (same shapes / init scheme as the module).
    emb_weight = _xavier_uniform(k_emb, (num_embeddings, proj_embedding_dim))
    proj_weight = _xavier_uniform(k_proj, (base_dim, proj_embedding_dim))
    # NOTE: proj_embedding_dim < base_dim -> Linear path.  For the
    # proj_embedding_dim == base_dim Identity path call with proj_weight=None.

    # Small index tensor: batch=2, seq=8.
    indices = jax.random.randint(
        k_idx, (2, 8), 0, num_embeddings, dtype=jnp.int32
    )

    out = pr_embedding_bag(indices, emb_weight, proj_weight)
    out = jax.block_until_ready(out)

    # Reference check in plain JAX (f32).  The kernel stores the fused table in
    # bf16 (explicit perf decision), so tolerances are set accordingly.
    ref = jnp.take(emb_weight, indices, axis=0) @ proj_weight.T
    assert out.shape == (2, 8, base_dim), out.shape
    assert jnp.allclose(out, ref, atol=2e-2, rtol=2e-2), (
        float(jnp.max(jnp.abs(out - ref)))
    )

    print("KERNEL_OK")
</pallas_src>

<mosaic_0001>
module attributes {stable_mosaic.version = 11 : i64} {
  func.func @_fuse_table_kernel(%arg0: i32, %arg1: memref<128x128xf32, #tpu.memory_space<vmem>>, %arg2: memref<128x128xf32, #tpu.memory_space<vmem>>, %arg3: memref<128x128xbf16, #tpu.memory_space<vmem>>) attributes {dimension_semantics = [#tpu.dimension_semantics<parallel>], iteration_bounds = array<i64: 1>, scalar_prefetch = 0 : i64, scratch_operands = 0 : i64, tpu.core_type = #tpu.core_type<tc>, window_params = [{transform_indices = @transform_0, window_bounds = array<i64: 128, 128>}, {pipeline_mode = #tpu.pipeline_mode<synchronous>, transform_indices = @transform_1, window_bounds = array<i64: 128, 128>}, {transform_indices = @transform_2, window_bounds = array<i64: 128, 128>}]} {
    %c0 = arith.constant 0 : index
    %c0_0 = arith.constant 0 : index
    %0 = vector.load %arg1[%c0, %c0_0] : memref<128x128xf32, #tpu.memory_space<vmem>>, vector<128x128xf32>
    %c0_1 = arith.constant 0 : index
    %c0_2 = arith.constant 0 : index
    %1 = vector.load %arg2[%c0_1, %c0_2] : memref<128x128xf32, #tpu.memory_space<vmem>>, vector<128x128xf32>
    %cst = arith.constant dense<0.000000e+00> : vector<128x128xf32>
    %2 = tpu.matmul %0, %1, %cst {dimension_numbers = #tpu.dot_dimension_numbers<[1], [0], [0], [1], [0, 0, 1, 1], [], []>, precision = #tpu.contract_precision<fp32>} : vector<128x128xf32>, vector<128x128xf32>, vector<128x128xf32> -> vector<128x128xf32>
    %3 = arith.truncf %2 : vector<128x128xf32> to vector<128x128xbf16>
    %c0_3 = arith.constant 0 : index
    %c0_4 = arith.constant 0 : index
    %4 = vector.load %arg3[%c0_3, %c0_4] : memref<128x128xbf16, #tpu.memory_space<vmem>>, vector<128x128xbf16>
    tpu.vector_store %arg3[%c0_3, %c0_4], %3 {strides = array<i32>} : memref<128x128xbf16, #tpu.memory_space<vmem>>, vector<128x128xbf16>,
    return
  }
  func.func @transform_0(%arg0: i32) -> (i32, i32) {
    %c0_i32 = arith.constant 0 : i32
    %c0_i32_0 = arith.constant 0 : i32
    return %arg0, %c0_i32 : i32, i32
  }
  func.func @transform_1(%arg0: i32) -> (i32, i32) {
    %c0_i32 = arith.constant 0 : i32
    %c0_i32_0 = arith.constant 0 : i32
    %c0_i32_1 = arith.constant 0 : i32
    return %c0_i32, %c0_i32_0 : i32, i32
  }
  func.func @transform_2(%arg0: i32) -> (i32, i32) {
    %c0_i32 = arith.constant 0 : i32
    %c0_i32_0 = arith.constant 0 : i32
    return %arg0, %c0_i32 : i32, i32
  }
}

</mosaic_0001>

<llo_original>
// kernel: tpu_custom_call.1
$region0: #{tpu_custom_call.1}
  #allocation0 [shape = 'u32[]', space=smem, size = 0x4, offset = 0x4, fixed_abs, tag = 'smem constant byte address 0x4 - core index']
  #allocation1 [shape = 'u32[144,128]{1,0:T(1,128)}', space=vmem, size = 0x12000, scoped, tag = 'internal scratch']
  %s0 = inlined_call_operand.hbm [shape: f32[128,128], index: 0, kind: input, shape index: {}]
  %s1 = inlined_call_operand.hbm [shape: f32[128,128], index: 1, kind: input, shape index: {}]
  %s2 = inlined_call_operand.hbm [shape: bf16[128,128], index: 2, kind: output, shape index: {}]
  %s3 = sld [smem:[#allocation0]]
  $region26: #{tpu_custom_call.1} parent=0
    _
  %s5 = ssub.s32 1, %s3
  %s6 = scalar_select 0, %s5, %s3
  $region1: #{tpu_custom_call.1} parent=0
    #allocation2 [shape = 'u8[65536]{0}', space=vmem, size = 0x10000, scoped, tag = 'input window, operand 0, single buffered']
    #allocation3 [shape = 's32[1]{0}', space=sflag, size = 0x4, scoped, tag = 'scoped memory for tpu_custom_call.1']
    #allocation4 [shape = 's32[1]{0}', space=sflag, size = 0x4, scoped, tag = 'scoped memory for tpu_custom_call.1']
    #allocation5 [shape = 'u8[65536]{0}', space=vmem, size = 0x10000, scoped, tag = 'input window, operand 1, single buffered']
    #allocation6 [shape = 's32[1]{0}', space=sflag, size = 0x4, scoped, tag = 'scoped memory for tpu_custom_call.1']
    #allocation7 [shape = 'u8[32768]{0}', space=vmem, size = 0x8000, scoped, tag = 'output window, operand 0, single buffered']
    %7 = vsyncpa [#allocation3], 0
    %8 = vsyncpa [#allocation6], 0
    %9 = vsyncpa [#allocation4], 0
    // Predicated region
    $region2: #{tpu_custom_call.1} parent=1 // pred_check
      _
    $region3: #{tpu_custom_call.1} parent=1 // pred_check_branch
      %11 = sbr.rel (0) target = $region5
    $region4: #{tpu_custom_call.1} parent=1 // pred_region
      %s13 = ssub.s32 2048, 2048
      %14 = vsyncadd [#allocation3], %s13
      %s15 = sshll.u32 [#allocation2], 4
      %s16 = int_to_ptr.vmem [resolvable:$true] %s15
      %21 = dma.hbm_to_vmem [thread:$0]  %s0, 2048, %s16, [#allocation3], 128, 128, 8
    $region5: #{tpu_custom_call.1} parent=1 // pred_fallthru
      _
    // Predicated region
    $region6: #{tpu_custom_call.1} parent=1 // pred_check
      _
    $region7: #{tpu_custom_call.1} parent=1 // pred_check_branch
      %23 = sbr.rel (0) target = $region9
    $region8: #{tpu_custom_call.1} parent=1 // pred_region
      %s25 = ssub.s32 2048, 2048
      %26 = vsyncadd [#allocation6], %s25
      %s27 = sshll.u32 [#allocation5], 4
      %s28 = int_to_ptr.vmem [resolvable:$true] %s27
      %33 = dma.hbm_to_vmem [thread:$0]  %s1, 2048, %s28, [#allocation6], 128, 128, 8
    $region9: #{tpu_custom_call.1} parent=1 // pred_fallthru
      _
    // Predicated region
    $region10: #{tpu_custom_call.1} parent=1 // pred_check
      _
    $region11: #{tpu_custom_call.1} parent=1 // pred_check_branch
      %35 = sbr.rel (0) target = $region13
    $region12: #{tpu_custom_call.1} parent=1 // pred_region
      %36 = dma.done [#allocation3], 2048
    $region13: #{tpu_custom_call.1} parent=1 // pred_fallthru
      _
    // Predicated region
    $region14: #{tpu_custom_call.1} parent=1 // pred_check
      _
    $region15: #{tpu_custom_call.1} parent=1 // pred_check_branch
      %38 = sbr.rel (0) target = $region17
    $region16: #{tpu_custom_call.1} parent=1 // pred_region
      %39 = dma.done [#allocation6], 2048
    $region17: #{tpu_custom_call.1} parent=1 // pred_fallthru
      _
    %v40 = vld [vmem:[#allocation2] sm:$0xff]
    %v41 = vld [vmem:[#allocation2 + $0x8] sm:$0xff]
    %v42 = vld [vmem:[#allocation2 + $0x10] sm:$0xff]
    %v43 = vld [vmem:[#allocation2 + $0x18] sm:$0xff]
    %v44 = vld [vmem:[#allocation2 + $0x20] sm:$0xff]
    %v45 = vld [vmem:[#allocation2 + $0x28] sm:$0xff]
    %v46 = vld [vmem:[#allocation2 + $0x30] sm:$0xff]
    %v47 = vld [vmem:[#allocation2 + $0x38] sm:$0xff]
    %v48 = vld [vmem:[#allocation2 + $0x40] sm:$0xff]
    %v49 = vld [vmem:[#allocation2 + $0x48] sm:$0xff]
    %v50 = vld [vmem:[#allocation2 + $0x50] sm:$0xff]
    %v51 = vld [vmem:[#allocation2 + $0x58] sm:$0xff]
    %v52 = vld [vmem:[#allocation2 + $0x60] sm:$0xff]
    %v53 = vld [vmem:[#allocation2 + $0x68] sm:$0xff]
    %v54 = vld [vmem:[#allocation2 + $0x70] sm:$0xff]
    %v55 = vld [vmem:[#allocation2 + $0x78] sm:$0xff]
    %v56 = vld [vmem:[#allocation5] sm:$0xff]
    %v57 = vld [vmem:[#allocation5 + $0x8] sm:$0xff]
    %v58 = vld [vmem:[#allocation5 + $0x10] sm:$0xff]
    %v59 = vld [vmem:[#allocation5 + $0x18] sm:$0xff]
    %v60 = vld [vmem:[#allocation5 + $0x20] sm:$0xff]
    %v61 = vld [vmem:[#allocation5 + $0x28] sm:$0xff]
    %v62 = vld [vmem:[#allocation5 + $0x30] sm:$0xff]
    %v63 = vld [vmem:[#allocation5 + $0x38] sm:$0xff]
    %v64 = vld [vmem:[#allocation5 + $0x40] sm:$0xff]
    %v65 = vld [vmem:[#allocation5 + $0x48] sm:$0xff]
    %v66 = vld [vmem:[#allocation5 + $0x50] sm:$0xff]
    %v67 = vld [vmem:[#allocation5 + $0x58] sm:$0xff]
    %v68 = vld [vmem:[#allocation5 + $0x60] sm:$0xff]
    %v69 = vld [vmem:[#allocation5 + $0x68] sm:$0xff]
    %v70 = vld [vmem:[#allocation5 + $0x70] sm:$0xff]
    %v71 = vld [vmem:[#allocation5 + $0x78] sm:$0xff]
    %72 = vmatprep.subr.mxu0 0.0
    %v73 = vand.u32 %v71, 4294901760
    %74 = vmatpush1.msra.mxu0 %v73
    %75 = vmatprep.subr.mxu0 0.0
    %v76 = vand.u32 %v70, 4294901760
    %77 = vmatpush1.msra.mxu0 %v76
    %78 = vmatprep.subr.mxu0 0.0
    %v79 = vand.u32 %v69, 4294901760
    %80 = vmatpush1.msra.mxu0 %v79
    %81 = vmatprep.subr.mxu0 0.0
    %v82 = vand.u32 %v68, 4294901760
    %83 = vmatpush1.msra.mxu0 %v82
    %84 = vmatprep.subr.mxu0 0.0
    %v85 = vand.u32 %v67, 4294901760
    %86 = vmatpush1.msra.mxu0 %v85
    %87 = vmatprep.subr.mxu0 0.0
    %v88 = vand.u32 %v66, 4294901760
    %89 = vmatpush1.msra.mxu0 %v88
    %90 = vmatprep.subr.mxu0 0.0
    %v91 = vand.u32 %v65, 4294901760
    %92 = vmatpush1.msra.mxu0 %v91
    %93 = vmatprep.subr.mxu0 0.0
    %v94 = vand.u32 %v64, 4294901760
    %95 = vmatpush1.msra.mxu0 %v94
    %96 = vmatprep.subr.mxu0 0.0
    %v97 = vand.u32 %v63, 4294901760
    %98 = vmatpush1.msra.mxu0 %v97
    %99 = vmatprep.subr.mxu0 0.0
    %v100 = vand.u32 %v62, 4294901760
    %101 = vmatpush1.msra.mxu0 %v100
    %102 = vmatprep.subr.mxu0 0.0
    %v103 = vand.u32 %v61, 4294901760
    %104 = vmatpush1.msra.mxu0 %v103
    %105 = vmatprep.subr.mxu0 0.0
    %v106 = vand.u32 %v60, 4294901760
    %107 = vmatpush1.msra.mxu0 %v106
    %108 = vmatprep.subr.mxu0 0.0
    %v109 = vand.u32 %v59, 4294901760
    %110 = vmatpush1.msra.mxu0 %v109
    %111 = vmatprep.subr.mxu0 0.0
    %v112 = vand.u32 %v58, 4294901760
    %113 = vmatpush1.msra.mxu0 %v112
    %114 = vmatprep.subr.mxu0 0.0
    %v115 = vand.u32 %v57, 4294901760
    %116 = vmatpush1.msra.mxu0 %v115
    %117 = vmatprep.subr.mxu0 0.0
    %v118 = vand.u32 %v56, 4294901760
    %119 = vmatpush1.msra.mxu0 %v118
    %120 = vmatprep.subr.mxu0 0.0
    %121 = vmatpush2.msra.mxu0 0.0
    %122 = vmatprep.subr.mxu0 0.0
    %123 = vmatpush2.msra.mxu0 0.0
    %124 = vmatprep.subr.mxu0 0.0
    %125 = vmatpush2.msra.mxu0 0.0
    %126 = vmatprep.subr.mxu0 0.0
    %127 = vmatpush2.msra.mxu0 0.0
    %128 = vmatprep.subr.mxu0 0.0
    %129 = vmatpush2.msra.mxu0 0.0
    %130 = vmatprep.subr.mxu0 0.0
    %131 = vmatpush2.msra.mxu0 0.0
    %132 = vmatprep.subr.mxu0 0.0
    %133 = vmatpush2.msra.mxu0 0.0
    %134 = vmatprep.subr.mxu0 0.0
    %135 = vmatpush2.msra.mxu0 0.0
    %136 = vmatprep.subr.mxu0 0.0
    %137 = vmatpush2.msra.mxu0 0.0
    %138 = vmatprep.subr.mxu0 0.0
    %139 = vmatpush2.msra.mxu0 0.0
    %140 = vmatprep.subr.mxu0 0.0
    %141 = vmatpush2.msra.mxu0 0.0
    %142 = vmatprep.subr.mxu0 0.0
    %143 = vmatpush2.msra.mxu0 0.0
    %144 = vmatprep.subr.mxu0 0.0
    %145 = vmatpush2.msra.mxu0 0.0
    %146 = vmatprep.subr.mxu0 0.0
    %147 = vmatpush2.msra.mxu0 0.0
    %148 = vmatprep.subr.mxu0 0.0
    %149 = vmatpush2.msra.mxu0 0.0
    %150 = vmatprep.subr.mxu0 0.0
    %151 = vmatpush2.msra.mxu0 0.0
    %152 = vmatprep.mubr.f32.mxu0 0.0
    %v153 = vand.u32 %v40, 4294901760
    %v154 = vsub.f32 %v40, %v153
    %v155 = vand.u32 %v154, 4294901760
    %v156 = vsub.f32 %v154, %v155
    %v157 = vand.u32 %v156, 4294901760
    %158 = vmatmul.mubr.f32.gmra.mxu0 %v157
    %v159 = vpop.f32.mrf.mxu0
    %v160 = vadd.f32 0.0, %v159
    %v161 = vpop.f32.mrf.mxu0
    %162 = vmatprep.mubr.f32.mxu0 0.0
    %v163 = vand.u32 %v41, 4294901760
    %v164 = vsub.f32 %v41, %v163
    %v165 = vand.u32 %v164, 4294901760
    %v166 = vsub.f32 %v164, %v165
    %v167 = vand.u32 %v166, 4294901760
    %168 = vmatmul.mubr.f32.gmra.mxu0 %v167
    %v169 = vpop.f32.mrf.mxu0
    %v170 = vadd.f32 0.0, %v169
    %v171 = vpop.f32.mrf.mxu0
    %172 = vmatprep.mubr.f32.mxu0 0.0
    %v173 = vand.u32 %v42, 4294901760
    %v174 = vsub.f32 %v42, %v173
    %v175 = vand.u32 %v174, 4294901760
    %v176 = vsub.f32 %v174, %v175
    %v177 = vand.u32 %v176, 4294901760
    %178 = vmatmul.mubr.f32.gmra.mxu0 %v177
    %v179 = vpop.f32.mrf.mxu0
    %v180 = vadd.f32 0.0, %v179
    %v181 = vpop.f32.mrf.mxu0
    %182 = vmatprep.mubr.f32.mxu0 0.0
    %v183 = vand.u32 %v43, 4294901760
    %v184 = vsub.f32 %v43, %v183
    %v185 = vand.u32 %v184, 4294901760
    %v186 = vsub.f32 %v184, %v185
    %v187 = vand.u32 %v186, 4294901760
    %188 = vmatmul.mubr.f32.gmra.mxu0 %v187
    %v189 = vpop.f32.mrf.mxu0
    %v190 = vadd.f32 0.0, %v189
    %v191 = vpop.f32.mrf.mxu0
    %192 = vmatprep.mubr.f32.mxu0 0.0
    %v193 = vand.u32 %v44, 4294901760
    %v194 = vsub.f32 %v44, %v193
    %v195 = vand.u32 %v194, 4294901760
    %v196 = vsub.f32 %v194, %v195
    %v197 = vand.u32 %v196, 4294901760
    %198 = vmatmul.mubr.f32.gmra.mxu0 %v197
    %v199 = vpop.f32.mrf.mxu0
    %v200 = vadd.f32 0.0, %v199
    %v201 = vpop.f32.mrf.mxu0
    %202 = vmatprep.mubr.f32.mxu0 0.0
    %v203 = vand.u32 %v45, 4294901760
    %v204 = vsub.f32 %v45, %v203
    %v205 = vand.u32 %v204, 4294901760
    %v206 = vsub.f32 %v204, %v205
    %v207 = vand.u32 %v206, 4294901760
    %208 = vmatmul.mubr.f32.gmra.mxu0 %v207
    %v209 = vpop.f32.mrf.mxu0
    %v210 = vadd.f32 0.0, %v209
    %v211 = vpop.f32.mrf.mxu0
    %212 = vmatprep.mubr.f32.mxu0 0.0
    %v213 = vand.u32 %v46, 4294901760
    %v214 = vsub.f32 %v46, %v213
    %v215 = vand.u32 %v214, 4294901760
    %v216 = vsub.f32 %v214, %v215
    %v217 = vand.u32 %v216, 4294901760
    %218 = vmatmul.mubr.f32.gmra.mxu0 %v217
    %v219 = vpop.f32.mrf.mxu0
    %v220 = vadd.f32 0.0, %v219
    %v221 = vpop.f32.mrf.mxu0
    %222 = vmatprep.mubr.f32.mxu0 0.0
    %v223 = vand.u32 %v47, 4294901760
    %v224 = vsub.f32 %v47, %v223
    %v225 = vand.u32 %v224, 4294901760
    %v226 = vsub.f32 %v224, %v225
    %v227 = vand.u32 %v226, 4294901760
    %228 = vmatmul.mubr.f32.gmra.mxu0 %v227
    %v229 = vpop.f32.mrf.mxu0
    %v230 = vadd.f32 0.0, %v229
    %v231 = vpop.f32.mrf.mxu0
    %232 = vmatprep.mubr.f32.mxu0 0.0
    %v233 = vand.u32 %v48, 4294901760
    %v234 = vsub.f32 %v48, %v233
    %v235 = vand.u32 %v234, 4294901760
    %v236 = vsub.f32 %v234, %v235
    %v237 = vand.u32 %v236, 4294901760
    %238 = vmatmul.mubr.f32.gmra.mxu0 %v237
    %v239 = vpop.f32.mrf.mxu0
    %v240 = vadd.f32 0.0, %v239
    %v241 = vpop.f32.mrf.mxu0
    %242 = vmatprep.mubr.f32.mxu0 0.0
    %v243 = vand.u32 %v49, 4294901760
    %v244 = vsub.f32 %v49, %v243
    %v245 = vand.u32 %v244, 4294901760
    %v246 = vsub.f32 %v244, %v245
    %v247 = vand.u32 %v246, 4294901760
    %248 = vmatmul.mubr.f32.gmra.mxu0 %v247
    %v249 = vpop.f32.mrf.mxu0
    %v250 = vadd.f32 0.0, %v249
    %v251 = vpop.f32.mrf.mxu0
    %252 = vmatprep.mubr.f32.mxu0 0.0
    %v253 = vand.u32 %v50, 4294901760
    %v254 = vsub.f32 %v50, %v253
    %v255 = vand.u32 %v254, 4294901760
    %v256 = vsub.f32 %v254, %v255
    %v257 = vand.u32 %v256, 4294901760
    %258 = vmatmul.mubr.f32.gmra.mxu0 %v257
    %v259 = vpop.f32.mrf.mxu0
    %v260 = vadd.f32 0.0, %v259
    %v261 = vpop.f32.mrf.mxu0
    %262 = vmatprep.mubr.f32.mxu0 0.0
    %v263 = vand.u32 %v51, 4294901760
    %v264 = vsub.f32 %v51, %v263
    %v265 = vand.u32 %v264, 4294901760
    %v266 = vsub.f32 %v264, %v265
    %v267 = vand.u32 %v266, 4294901760
    %268 = vmatmul.mubr.f32.gmra.mxu0 %v267
    %v269 = vpop.f32.mrf.mxu0
    %v270 = vadd.f32 0.0, %v269
    %v271 = vpop.f32.mrf.mxu0
    %272 = vmatprep.mubr.f32.mxu0 0.0
    %v273 = vand.u32 %v52, 4294901760
    %v274 = vsub.f32 %v52, %v273
    %v275 = vand.u32 %v274, 4294901760
    %v276 = vsub.f32 %v274, %v275
    %v277 = vand.u32 %v276, 4294901760
    %278 = vmatmul.mubr.f32.gmra.mxu0 %v277
    %v279 = vpop.f32.mrf.mxu0
    %v280 = vadd.f32 0.0, %v279
    %v281 = vpop.f32.mrf.mxu0
    %282 = vmatprep.mubr.f32.mxu0 0.0
    %v283 = vand.u32 %v53, 4294901760
    %v284 = vsub.f32 %v53, %v283
    %v285 = vand.u32 %v284, 4294901760
    %v286 = vsub.f32 %v284, %v285
    %v287 = vand.u32 %v286, 4294901760
    %288 = vmatmul.mubr.f32.gmra.mxu0 %v287
    %v289 = vpop.f32.mrf.mxu0
    %v290 = vadd.f32 0.0, %v289
    %v291 = vpop.f32.mrf.mxu0
    %292 = vmatprep.mubr.f32.mxu0 0.0
    %v293 = vand.u32 %v54, 4294901760
    %v294 = vsub.f32 %v54, %v293
    %v295 = vand.u32 %v294, 4294901760
    %v296 = vsub.f32 %v294, %v295
    %v297 = vand.u32 %v296, 4294901760
    %298 = vmatmul.mubr.f32.gmra.mxu0 %v297
    %v299 = vpop.f32.mrf.mxu0
    %v300 = vadd.f32 0.0, %v299
    %v301 = vpop.f32.mrf.mxu0
    %302 = vmatprep.mubr.f32.mxu0 0.0
    %v303 = vand.u32 %v55, 4294901760
    %v304 = vsub.f32 %v55, %v303
    %v305 = vand.u32 %v304, 4294901760
    %v306 = vsub.f32 %v304, %v305
    %v307 = vand.u32 %v306, 4294901760
    %308 = vmatmul.mubr.f32.gmra.mxu0 %v307
    %v309 = vpop.f32.mrf.mxu0
    %v310 = vadd.f32 0.0, %v309
    %v311 = vpop.f32.mrf.mxu0
    %312 = vdwg.mxu0
    %313 = vmatprep.subr.mxu0 0.0
    %v314 = vand.u32 %v71, 4294901760
    %v315 = vsub.f32 %v71, %v314
    %v316 = vand.u32 %v315, 4294901760
    %v317 = vsub.f32 %v315, %v316
    %v318 = vand.u32 %v317, 4294901760
    %319 = vmatpush1.msra.mxu0 %v318
    %320 = vmatprep.subr.mxu0 0.0
    %v321 = vand.u32 %v70, 4294901760
    %v322 = vsub.f32 %v70, %v321
    %v323 = vand.u32 %v322, 4294901760
    %v324 = vsub.f32 %v322, %v323
    %v325 = vand.u32 %v324, 4294901760
    %326 = vmatpush1.msra.mxu0 %v325
    %327 = vmatprep.subr.mxu0 0.0
    %v328 = vand.u32 %v69, 4294901760
    %v329 = vsub.f32 %v69, %v328
    %v330 = vand.u32 %v329, 4294901760
    %v331 = vsub.f32 %v329, %v330
    %v332 = vand.u32 %v331, 4294901760
    %333 = vmatpush1.msra.mxu0 %v332
    %334 = vmatprep.subr.mxu0 0.0
    %v335 = vand.u32 %v68, 4294901760
    %v336 = vsub.f32 %v68, %v335
    %v337 = vand.u32 %v336, 4294901760
    %v338 = vsub.f32 %v336, %v337
    %v339 = vand.u32 %v338, 4294901760
    %340 = vmatpush1.msra.mxu0 %v339
    %341 = vmatprep.subr.mxu0 0.0
    %v342 = vand.u32 %v67, 4294901760
    %v343 = vsub.f32 %v67, %v342
    %v344 = vand.u32 %v343, 4294901760
    %v345 = vsub.f32 %v343, %v344
    %v346 = vand.u32 %v345, 4294901760
    %347 = vmatpush1.msra.mxu0 %v346
    %348 = vmatprep.subr.mxu0 0.0
    %v349 = vand.u32 %v66, 4294901760
    %v350 = vsub.f32 %v66, %v349
    %v351 = vand.u32 %v350, 4294901760
    %v352 = vsub.f32 %v350, %v351
    %v353 = vand.u32 %v352, 4294901760
    %354 = vmatpush1.msra.mxu0 %v353
    %355 = vmatprep.subr.mxu0 0.0
    %v356 = vand.u32 %v65, 4294901760
    %v357 = vsub.f32 %v65, %v356
    %v358 = vand.u32 %v357, 4294901760
    %v359 = vsub.f32 %v357, %v358
    %v360 = vand.u32 %v359, 4294901760
    %361 = vmatpush1.msra.mxu0 %v360
    %362 = vmatprep.subr.mxu0 0.0
    %v363 = vand.u32 %v64, 4294901760
    %v364 = vsub.f32 %v64, %v363
    %v365 = vand.u32 %v364, 4294901760
    %v366 = vsub.f32 %v364, %v365
    %v367 = vand.u32 %v366, 4294901760
    %368 = vmatpush1.msra.mxu0 %v367
    %369 = vmatprep.subr.mxu0 0.0
    %v370 = vand.u32 %v63, 4294901760
    %v371 = vsub.f32 %v63, %v370
    %v372 = vand.u32 %v371, 4294901760
    %v373 = vsub.f32 %v371, %v372
    %v374 = vand.u32 %v373, 4294901760
    %375 = vmatpush1.msra.mxu0 %v374
    %376 = vmatprep.subr.mxu0 0.0
    %v377 = vand.u32 %v62, 4294901760
    %v378 = vsub.f32 %v62, %v377
    %v379 = vand.u32 %v378, 4294901760
    %v380 = vsub.f32 %v378, %v379
    %v381 = vand.u32 %v380, 4294901760
    %382 = vmatpush1.msra.mxu0 %v381
    %383 = vmatprep.subr.mxu0 0.0
    %v384 = vand.u32 %v61, 4294901760
    %v385 = vsub.f32 %v61, %v384
    %v386 = vand.u32 %v385, 4294901760
    %v387 = vsub.f32 %v385, %v386
    %v388 = vand.u32 %v387, 4294901760
    %389 = vmatpush1.msra.mxu0 %v388
    %390 = vmatprep.subr.mxu0 0.0
    %v391 = vand.u32 %v60, 4294901760
    %v392 = vsub.f32 %v60, %v391
    %v393 = vand.u32 %v392, 4294901760
    %v394 = vsub.f32 %v392, %v393
    %v395 = vand.u32 %v394, 4294901760
    %396 = vmatpush1.msra.mxu0 %v395
    %397 = vmatprep.subr.mxu0 0.0
    %v398 = vand.u32 %v59, 4294901760
    %v399 = vsub.f32 %v59, %v398
    %v400 = vand.u32 %v399, 4294901760
    %v401 = vsub.f32 %v399, %v400
    %v402 = vand.u32 %v401, 4294901760
    %403 = vmatpush1.msra.mxu0 %v402
    %404 = vmatprep.subr.mxu0 0.0
    %v405 = vand.u32 %v58, 4294901760
    %v406 = vsub.f32 %v58, %v405
    %v407 = vand.u32 %v406, 4294901760
    %v408 = vsub.f32 %v406, %v407
    %v409 = vand.u32 %v408, 4294901760
    %410 = vmatpush1.msra.mxu0 %v409
    %411 = vmatprep.subr.mxu0 0.0
    %v412 = vand.u32 %v57, 4294901760
    %v413 = vsub.f32 %v57, %v412
    %v414 = vand.u32 %v413, 4294901760
    %v415 = vsub.f32 %v413, %v414
    %v416 = vand.u32 %v415, 4294901760
    %417 = vmatpush1.msra.mxu0 %v416
    %418 = vmatprep.subr.mxu0 0.0
    %v419 = vand.u32 %v56, 4294901760
    %v420 = vsub.f32 %v56, %v419
    %v421 = vand.u32 %v420, 4294901760
    %v422 = vsub.f32 %v420, %v421
    %v423 = vand.u32 %v422, 4294901760
    %424 = vmatpush1.msra.mxu0 %v423
    %425 = vmatprep.subr.mxu0 0.0
    %426 = vmatpush2.msra.mxu0 0.0
    %427 = vmatprep.subr.mxu0 0.0
    %428 = vmatpush2.msra.mxu0 0.0
    %429 = vmatprep.subr.mxu0 0.0
    %430 = vmatpush2.msra.mxu0 0.0
    %431 = vmatprep.subr.mxu0 0.0
    %432 = vmatpush2.msra.mxu0 0.0
    %433 = vmatprep.subr.mxu0 0.0
    %434 = vmatpush2.msra.mxu0 0.0
    %435 = vmatprep.subr.mxu0 0.0
    %436 = vmatpush2.msra.mxu0 0.0
    %437 = vmatprep.subr.mxu0 0.0
    %438 = vmatpush2.msra.mxu0 0.0
    %439 = vmatprep.subr.mxu0 0.0
    %440 = vmatpush2.msra.mxu0 0.0
    %441 = vmatprep.subr.mxu0 0.0
    %442 = vmatpush2.msra.mxu0 0.0
    %443 = vmatprep.subr.mxu0 0.0
    %444 = vmatpush2.msra.mxu0 0.0
    %445 = vmatprep.subr.mxu0 0.0
    %446 = vmatpush2.msra.mxu0 0.0
    %447 = vmatprep.subr.mxu0 0.0
    %448 = vmatpush2.msra.mxu0 0.0
    %449 = vmatprep.subr.mxu0 0.0
    %450 = vmatpush2.msra.mxu0 0.0
    %451 = vmatprep.subr.mxu0 0.0
    %452 = vmatpush2.msra.mxu0 0.0
    %453 = vmatprep.subr.mxu0 0.0
    %454 = vmatpush2.msra.mxu0 0.0
    %455 = vmatprep.subr.mxu0 0.0
    %456 = vmatpush2.msra.mxu0 0.0
    %457 = vmatprep.mubr.f32.mxu0 0.0
    %v458 = vand.u32 %v40, 4294901760
    %459 = vmatmul.mubr.f32.gmra.mxu0 %v458
    %v460 = vpop.f32.mrf.mxu0
    %v461 = vadd.f32 %v160, %v460
    %v462 = vpop.f32.mrf.mxu0
    %463 = vmatprep.mubr.f32.mxu0 0.0
    %v464 = vand.u32 %v41, 4294901760
    %465 = vmatmul.mubr.f32.gmra.mxu0 %v464
    %v466 = vpop.f32.mrf.mxu0
    %v467 = vadd.f32 %v170, %v466
    %v468 = vpop.f32.mrf.mxu0
    %469 = vmatprep.mubr.f32.mxu0 0.0
    %v470 = vand.u32 %v42, 4294901760
    %471 = vmatmul.mubr.f32.gmra.mxu0 %v470
    %v472 = vpop.f32.mrf.mxu0
    %v473 = vadd.f32 %v180, %v472
    %v474 = vpop.f32.mrf.mxu0
    %475 = vmatprep.mubr.f32.mxu0 0.0
    %v476 = vand.u32 %v43, 4294901760
    %477 = vmatmul.mubr.f32.gmra.mxu0 %v476
    %v478 = vpop.f32.mrf.mxu0
    %v479 = vadd.f32 %v190, %v478
    %v480 = vpop.f32.mrf.mxu0
    %481 = vmatprep.mubr.f32.mxu0 0.0
    %v482 = vand.u32 %v44, 4294901760
    %483 = vmatmul.mubr.f32.gmra.mxu0 %v482
    %v484 = vpop.f32.mrf.mxu0
    %v485 = vadd.f32 %v200, %v484
    %v486 = vpop.f32.mrf.mxu0
    %487 = vmatprep.mubr.f32.mxu0 0.0
    %v488 = vand.u32 %v45, 4294901760
    %489 = vmatmul.mubr.f32.gmra.mxu0 %v488
    %v490 = vpop.f32.mrf.mxu0
    %v491 = vadd.f32 %v210, %v490
    %v492 = vpop.f32.mrf.mxu0
    %493 = vmatprep.mubr.f32.mxu0 0.0
    %v494 = vand.u32 %v46, 4294901760
    %495 = vmatmul.mubr.f32.gmra.mxu0 %v494
    %v496 = vpop.f32.mrf.mxu0
    %v497 = vadd.f32 %v220, %v496
    %v498 = vpop.f32.mrf.mxu0
    %499 = vmatprep.mubr.f32.mxu0 0.0
    %v500 = vand.u32 %v47, 4294901760
    %501 = vmatmul.mubr.f32.gmra.mxu0 %v500
    %v502 = vpop.f32.mrf.mxu0
    %v503 = vadd.f32 %v230, %v502
    %v504 = vpop.f32.mrf.mxu0
    %505 = vmatprep.mubr.f32.mxu0 0.0
    %v506 = vand.u32 %v48, 4294901760
    %507 = vmatmul.mubr.f32.gmra.mxu0 %v506
    %v508 = vpop.f32.mrf.mxu0
    %v509 = vadd.f32 %v240, %v508
    %v510 = vpop.f32.mrf.mxu0
    %511 = vmatprep.mubr.f32.mxu0 0.0
    %v512 = vand.u32 %v49, 4294901760
    %513 = vmatmul.mubr.f32.gmra.mxu0 %v512
    %v514 = vpop.f32.mrf.mxu0
    %v515 = vadd.f32 %v250, %v514
    %v516 = vpop.f32.mrf.mxu0
    %517 = vmatprep.mubr.f32.mxu0 0.0
    %v518 = vand.u32 %v50, 4294901760
    %519 = vmatmul.mubr.f32.gmra.mxu0 %v518
    %v520 = vpop.f32.mrf.mxu0
    %v521 = vadd.f32 %v260, %v520
    %v522 = vpop.f32.mrf.mxu0
    %523 = vmatprep.mubr.f32.mxu0 0.0
    %v524 = vand.u32 %v51, 4294901760
    %525 = vmatmul.mubr.f32.gmra.mxu0 %v524
    %v526 = vpop.f32.mrf.mxu0
    %v527 = vadd.f32 %v270, %v526
    %v528 = vpop.f32.mrf.mxu0
    %529 = vmatprep.mubr.f32.mxu0 0.0
    %v530 = vand.u32 %v52, 4294901760
    %531 = vmatmul.mubr.f32.gmra.mxu0 %v530
    %v532 = vpop.f32.mrf.mxu0
    %v533 = vadd.f32 %v280, %v532
    %v534 = vpop.f32.mrf.mxu0
    %535 = vmatprep.mubr.f32.mxu0 0.0
    %v536 = vand.u32 %v53, 4294901760
    %537 = vmatmul.mubr.f32.gmra.mxu0 %v536
    %v538 = vpop.f32.mrf.mxu0
    %v539 = vadd.f32 %v290, %v538
    %v540 = vpop.f32.mrf.mxu0
    %541 = vmatprep.mubr.f32.mxu0 0.0
    %v542 = vand.u32 %v54, 4294901760
    %543 = vmatmul.mubr.f32.gmra.mxu0 %v542
    %v544 = vpop.f32.mrf.mxu0
    %v545 = vadd.f32 %v300, %v544
    %v546 = vpop.f32.mrf.mxu0
    %547 = vmatprep.mubr.f32.mxu0 0.0
    %v548 = vand.u32 %v55, 4294901760
    %549 = vmatmul.mubr.f32.gmra.mxu0 %v548
    %v550 = vpop.f32.mrf.mxu0
    %v551 = vadd.f32 %v310, %v550
    %v552 = vpop.f32.mrf.mxu0
    %553 = vdwg.mxu0
    %554 = vmatprep.subr.mxu0 0.0
    %v555 = vand.u32 %v71, 4294901760
    %v556 = vsub.f32 %v71, %v555
    %557 = vmatpush1.msra.mxu0 %v556
    %558 = vmatprep.subr.mxu0 0.0
    %v559 = vand.u32 %v70, 4294901760
    %v560 = vsub.f32 %v70, %v559
    %561 = vmatpush1.msra.mxu0 %v560
    %562 = vmatprep.subr.mxu0 0.0
    %v563 = vand.u32 %v69, 4294901760
    %v564 = vsub.f32 %v69, %v563
    %565 = vmatpush1.msra.mxu0 %v564
    %566 = vmatprep.subr.mxu0 0.0
    %v567 = vand.u32 %v68, 4294901760
    %v568 = vsub.f32 %v68, %v567
    %569 = vmatpush1.msra.mxu0 %v568
    %570 = vmatprep.subr.mxu0 0.0
    %v571 = vand.u32 %v67, 4294901760
    %v572 = vsub.f32 %v67, %v571
    %573 = vmatpush1.msra.mxu0 %v572
    %574 = vmatprep.subr.mxu0 0.0
    %v575 = vand.u32 %v66, 4294901760
    %v576 = vsub.f32 %v66, %v575
    %577 = vmatpush1.msra.mxu0 %v576
    %578 = vmatprep.subr.mxu0 0.0
    %v579 = vand.u32 %v65, 4294901760
    %v580 = vsub.f32 %v65, %v579
    %581 = vmatpush1.msra.mxu0 %v580
    %582 = vmatprep.subr.mxu0 0.0
    %v583 = vand.u32 %v64, 4294901760
    %v584 = vsub.f32 %v64, %v583
    %585 = vmatpush1.msra.mxu0 %v584
    %586 = vmatprep.subr.mxu0 0.0
    %v587 = vand.u32 %v63, 4294901760
    %v588 = vsub.f32 %v63, %v587
    %589 = vmatpush1.msra.mxu0 %v588
    %590 = vmatprep.subr.mxu0 0.0
    %v591 = vand.u32 %v62, 4294901760
    %v592 = vsub.f32 %v62, %v591
    %593 = vmatpush1.msra.mxu0 %v592
    %594 = vmatprep.subr.mxu0 0.0
    %v595 = vand.u32 %v61, 4294901760
    %v596 = vsub.f32 %v61, %v595
    %597 = vmatpush1.msra.mxu0 %v596
    %598 = vmatprep.subr.mxu0 0.0
    %v599 = vand.u32 %v60, 4294901760
    %v600 = vsub.f32 %v60, %v599
    %601 = vmatpush1.msra.mxu0 %v600
    %602 = vmatprep.subr.mxu0 0.0
    %v603 = vand.u32 %v59, 4294901760
    %v604 = vsub.f32 %v59, %v603
    %605 = vmatpush1.msra.mxu0 %v604
    %606 = vmatprep.subr.mxu0 0.0
    %v607 = vand.u32 %v58, 4294901760
    %v608 = vsub.f32 %v58, %v607
    %609 = vmatpush1.msra.mxu0 %v608
    %610 = vmatprep.subr.mxu0 0.0
    %v611 = vand.u32 %v57, 4294901760
    %v612 = vsub.f32 %v57, %v611
    %613 = vmatpush1.msra.mxu0 %v612
    %614 = vmatprep.subr.mxu0 0.0
    %v615 = vand.u32 %v56, 4294901760
    %v616 = vsub.f32 %v56, %v615
    %617 = vmatpush1.msra.mxu0 %v616
    %618 = vmatprep.subr.mxu0 0.0
    %619 = vmatpush2.msra.mxu0 0.0
    %620 = vmatprep.subr.mxu0 0.0
    %621 = vmatpush2.msra.mxu0 0.0
    %622 = vmatprep.subr.mxu0 0.0
    %623 = vmatpush2.msra.mxu0 0.0
    %624 = vmatprep.subr.mxu0 0.0
    %625 = vmatpush2.msra.mxu0 0.0
    %626 = vmatprep.subr.mxu0 0.0
    %627 = vmatpush2.msra.mxu0 0.0
    %628 = vmatprep.subr.mxu0 0.0
    %629 = vmatpush2.msra.mxu0 0.0
    %630 = vmatprep.subr.mxu0 0.0
    %631 = vmatpush2.msra.mxu0 0.0
    %632 = vmatprep.subr.mxu0 0.0
    %633 = vmatpush2.msra.mxu0 0.0
    %634 = vmatprep.subr.mxu0 0.0
    %635 = vmatpush2.msra.mxu0 0.0
    %636 = vmatprep.subr.mxu0 0.0
    %637 = vmatpush2.msra.mxu0 0.0
    %638 = vmatprep.subr.mxu0 0.0
    %639 = vmatpush2.msra.mxu0 0.0
    %640 = vmatprep.subr.mxu0 0.0
    %641 = vmatpush2.msra.mxu0 0.0
    %642 = vmatprep.subr.mxu0 0.0
    %643 = vmatpush2.msra.mxu0 0.0
    %644 = vmatprep.subr.mxu0 0.0
    %645 = vmatpush2.msra.mxu0 0.0
    %646 = vmatprep.subr.mxu0 0.0
    %647 = vmatpush2.msra.mxu0 0.0
    %648 = vmatprep.subr.mxu0 0.0
    %649 = vmatpush2.msra.mxu0 0.0
    %650 = vmatprep.mubr.f32.mxu0 0.0
    %v651 = vand.u32 %v40, 4294901760
    %v652 = vsub.f32 %v40, %v651
    %653 = vmatmul.mubr.f32.gmra.mxu0 %v652
    %v654 = vpop.f32.mrf.mxu0
    %v655 = vadd.f32 %v461, %v654
    %v656 = vpop.f32.mrf.mxu0
    %657 = vmatprep.mubr.f32.mxu0 0.0
    %v658 = vand.u32 %v41, 4294901760
    %v659 = vsub.f32 %v41, %v658
    %660 = vmatmul.mubr.f32.gmra.mxu0 %v659
    %v661 = vpop.f32.mrf.mxu0
    %v662 = vadd.f32 %v467, %v661
    %v663 = vpop.f32.mrf.mxu0
    %664 = vmatprep.mubr.f32.mxu0 0.0
    %v665 = vand.u32 %v42, 4294901760
    %v666 = vsub.f32 %v42, %v665
    %667 = vmatmul.mubr.f32.gmra.mxu0 %v666
    %v668 = vpop.f32.mrf.mxu0
    %v669 = vadd.f32 %v473, %v668
    %v670 = vpop.f32.mrf.mxu0
    %671 = vmatprep.mubr.f32.mxu0 0.0
    %v672 = vand.u32 %v43, 4294901760
    %v673 = vsub.f32 %v43, %v672
    %674 = vmatmul.mubr.f32.gmra.mxu0 %v673
    %v675 = vpop.f32.mrf.mxu0
    %v676 = vadd.f32 %v479, %v675
    %v677 = vpop.f32.mrf.mxu0
    %678 = vmatprep.mubr.f32.mxu0 0.0
    %v679 = vand.u32 %v44, 4294901760
    %v680 = vsub.f32 %v44, %v679
    %681 = vmatmul.mubr.f32.gmra.mxu0 %v680
    %v682 = vpop.f32.mrf.mxu0
    %v683 = vadd.f32 %v485, %v682
    %v684 = vpop.f32.mrf.mxu0
    %685 = vmatprep.mubr.f32.mxu0 0.0
    %v686 = vand.u32 %v45, 4294901760
    %v687 = vsub.f32 %v45, %v686
    %688 = vmatmul.mubr.f32.gmra.mxu0 %v687
    %v689 = vpop.f32.mrf.mxu0
    %v690 = vadd.f32 %v491, %v689
    %v691 = vpop.f32.mrf.mxu0
    %692 = vmatprep.mubr.f32.mxu0 0.0
    %v693 = vand.u32 %v46, 4294901760
    %v694 = vsub.f32 %v46, %v693
    %695 = vmatmul.mubr.f32.gmra.mxu0 %v694
    %v696 = vpop.f32.mrf.mxu0
    %v697 = vadd.f32 %v497, %v696
    %v698 = vpop.f32.mrf.mxu0
    %699 = vmatprep.mubr.f32.mxu0 0.0
    %v700 = vand.u32 %v47, 4294901760
    %v701 = vsub.f32 %v47, %v700
    %702 = vmatmul.mubr.f32.gmra.mxu0 %v701
    %v703 = vpop.f32.mrf.mxu0
    %v704 = vadd.f32 %v503, %v703
    %v705 = vpop.f32.mrf.mxu0
    %706 = vmatprep.mubr.f32.mxu0 0.0
    %v707 = vand.u32 %v48, 4294901760
    %v708 = vsub.f32 %v48, %v707
    %709 = vmatmul.mubr.f32.gmra.mxu0 %v708
    %v710 = vpop.f32.mrf.mxu0
    %v711 = vadd.f32 %v509, %v710
    %v712 = vpop.f32.mrf.mxu0
    %713 = vmatprep.mubr.f32.mxu0 0.0
    %v714 = vand.u32 %v49, 4294901760
    %v715 = vsub.f32 %v49, %v714
    %716 = vmatmul.mubr.f32.gmra.mxu0 %v715
    %v717 = vpop.f32.mrf.mxu0
    %v718 = vadd.f32 %v515, %v717
    %v719 = vpop.f32.mrf.mxu0
    %720 = vmatprep.mubr.f32.mxu0 0.0
    %v721 = vand.u32 %v50, 4294901760
    %v722 = vsub.f32 %v50, %v721
    %723 = vmatmul.mubr.f32.gmra.mxu0 %v722
    %v724 = vpop.f32.mrf.mxu0
    %v725 = vadd.f32 %v521, %v724
    %v726 = vpop.f32.mrf.mxu0
    %727 = vmatprep.mubr.f32.mxu0 0.0
    %v728 = vand.u32 %v51, 4294901760
    %v729 = vsub.f32 %v51, %v728
    %730 = vmatmul.mubr.f32.gmra.mxu0 %v729
    %v731 = vpop.f32.mrf.mxu0
    %v732 = vadd.f32 %v527, %v731
    %v733 = vpop.f32.mrf.mxu0
    %734 = vmatprep.mubr.f32.mxu0 0.0
    %v735 = vand.u32 %v52, 4294901760
    %v736 = vsub.f32 %v52, %v735
    %737 = vmatmul.mubr.f32.gmra.mxu0 %v736
    %v738 = vpop.f32.mrf.mxu0
    %v739 = vadd.f32 %v533, %v738
    %v740 = vpop.f32.mrf.mxu0
    %741 = vmatprep.mubr.f32.mxu0 0.0
    %v742 = vand.u32 %v53, 4294901760
    %v743 = vsub.f32 %v53, %v742
    %744 = vmatmul.mubr.f32.gmra.mxu0 %v743
    %v745 = vpop.f32.mrf.mxu0
    %v746 = vadd.f32 %v539, %v745
    %v747 = vpop.f32.mrf.mxu0
    %748 = vmatprep.mubr.f32.mxu0 0.0
    %v749 = vand.u32 %v54, 4294901760
    %v750 = vsub.f32 %v54, %v749
    %751 = vmatmul.mubr.f32.gmra.mxu0 %v750
    %v752 = vpop.f32.mrf.mxu0
    %v753 = vadd.f32 %v545, %v752
    %v754 = vpop.f32.mrf.mxu0
    %755 = vmatprep.mubr.f32.mxu0 0.0
    %v756 = vand.u32 %v55, 4294901760
    %v757 = vsub.f32 %v55, %v756
    %758 = vmatmul.mubr.f32.gmra.mxu0 %v757
    %v759 = vpop.f32.mrf.mxu0
    %v760 = vadd.f32 %v551, %v759
    %v761 = vpop.f32.mrf.mxu0
    %762 = vdwg.mxu0
    %763 = vmatprep.subr.mxu0 0.0
    %v764 = vand.u32 %v71, 4294901760
    %765 = vmatpush1.msra.mxu0 %v764
    %766 = vmatprep.subr.mxu0 0.0
    %v767 = vand.u32 %v70, 4294901760
    %768 = vmatpush1.msra.mxu0 %v767
    %769 = vmatprep.subr.mxu0 0.0
    %v770 = vand.u32 %v69, 4294901760
    %771 = vmatpush1.msra.mxu0 %v770
    %772 = vmatprep.subr.mxu0 0.0
    %v773 = vand.u32 %v68, 4294901760
    %774 = vmatpush1.msra.mxu0 %v773
    %775 = vmatprep.subr.mxu0 0.0
    %v776 = vand.u32 %v67, 4294901760
    %777 = vmatpush1.msra.mxu0 %v776
    %778 = vmatprep.subr.mxu0 0.0
    %v779 = vand.u32 %v66, 4294901760
    %780 = vmatpush1.msra.mxu0 %v779
    %781 = vmatprep.subr.mxu0 0.0
    %v782 = vand.u32 %v65, 4294901760
    %783 = vmatpush1.msra.mxu0 %v782
    %784 = vmatprep.subr.mxu0 0.0
    %v785 = vand.u32 %v64, 4294901760
    %786 = vmatpush1.msra.mxu0 %v785
    %787 = vmatprep.subr.mxu0 0.0
    %v788 = vand.u32 %v63, 4294901760
    %789 = vmatpush1.msra.mxu0 %v788
    %790 = vmatprep.subr.mxu0 0.0
    %v791 = vand.u32 %v62, 4294901760
    %792 = vmatpush1.msra.mxu0 %v791
    %793 = vmatprep.subr.mxu0 0.0
    %v794 = vand.u32 %v61, 4294901760
    %795 = vmatpush1.msra.mxu0 %v794
    %796 = vmatprep.subr.mxu0 0.0
    %v797 = vand.u32 %v60, 4294901760
    %798 = vmatpush1.msra.mxu0 %v797
    %799 = vmatprep.subr.mxu0 0.0
    %v800 = vand.u32 %v59, 4294901760
    %801 = vmatpush1.msra.mxu0 %v800
    %802 = vmatprep.subr.mxu0 0.0
    %v803 = vand.u32 %v58, 4294901760
    %804 = vmatpush1.msra.mxu0 %v803
    %805 = vmatprep.subr.mxu0 0.0
    %v806 = vand.u32 %v57, 4294901760
    %807 = vmatpush1.msra.mxu0 %v806
    %808 = vmatprep.subr.mxu0 0.0
    %v809 = vand.u32 %v56, 4294901760
    %810 = vmatpush1.msra.mxu0 %v809
    %811 = vmatprep.subr.mxu0 0.0
    %812 = vmatpush2.msra.mxu0 0.0
    %813 = vmatprep.subr.mxu0 0.0
    %814 = vmatpush2.msra.mxu0 0.0
    %815 = vmatprep.subr.mxu0 0.0
    %816 = vmatpush2.msra.mxu0 0.0
    %817 = vmatprep.subr.mxu0 0.0
    %818 = vmatpush2.msra.mxu0 0.0
    %819 = vmatprep.subr.mxu0 0.0
    %820 = vmatpush2.msra.mxu0 0.0
    %821 = vmatprep.subr.mxu0 0.0
    %822 = vmatpush2.msra.mxu0 0.0
    %823 = vmatprep.subr.mxu0 0.0
    %824 = vmatpush2.msra.mxu0 0.0
    %825 = vmatprep.subr.mxu0 0.0
    %826 = vmatpush2.msra.mxu0 0.0
    %827 = vmatprep.subr.mxu0 0.0
    %828 = vmatpush2.msra.mxu0 0.0
    %829 = vmatprep.subr.mxu0 0.0
    %830 = vmatpush2.msra.mxu0 0.0
    %831 = vmatprep.subr.mxu0 0.0
    %832 = vmatpush2.msra.mxu0 0.0
    %833 = vmatprep.subr.mxu0 0.0
    %834 = vmatpush2.msra.mxu0 0.0
    %835 = vmatprep.subr.mxu0 0.0
    %836 = vmatpush2.msra.mxu0 0.0
    %837 = vmatprep.subr.mxu0 0.0
    %838 = vmatpush2.msra.mxu0 0.0
    %839 = vmatprep.subr.mxu0 0.0
    %840 = vmatpush2.msra.mxu0 0.0
    %841 = vmatprep.subr.mxu0 0.0
    %842 = vmatpush2.msra.mxu0 0.0
    %843 = vmatprep.mubr.f32.mxu0 0.0
    %v844 = vand.u32 %v40, 4294901760
    %v845 = vsub.f32 %v40, %v844
    %v846 = vand.u32 %v845, 4294901760
    %847 = vmatmul.mubr.f32.gmra.mxu0 %v846
    %v848 = vpop.f32.mrf.mxu0
    %v849 = vadd.f32 %v655, %v848
    %v850 = vpop.f32.mrf.mxu0
    %851 = vmatprep.mubr.f32.mxu0 0.0
    %v852 = vand.u32 %v41, 4294901760
    %v853 = vsub.f32 %v41, %v852
    %v854 = vand.u32 %v853, 4294901760
    %855 = vmatmul.mubr.f32.gmra.mxu0 %v854
    %v856 = vpop.f32.mrf.mxu0
    %v857 = vadd.f32 %v662, %v856
    %v858 = vpop.f32.mrf.mxu0
    %859 = vmatprep.mubr.f32.mxu0 0.0
    %v860 = vand.u32 %v42, 4294901760
    %v861 = vsub.f32 %v42, %v860
    %v862 = vand.u32 %v861, 4294901760
    %863 = vmatmul.mubr.f32.gmra.mxu0 %v862
    %v864 = vpop.f32.mrf.mxu0
    %v865 = vadd.f32 %v669, %v864
    %v866 = vpop.f32.mrf.mxu0
    %867 = vmatprep.mubr.f32.mxu0 0.0
    %v868 = vand.u32 %v43, 4294901760
    %v869 = vsub.f32 %v43, %v868
    %v870 = vand.u32 %v869, 4294901760
    %871 = vmatmul.mubr.f32.gmra.mxu0 %v870
    %v872 = vpop.f32.mrf.mxu0
    %v873 = vadd.f32 %v676, %v872
    %v874 = vpop.f32.mrf.mxu0
    %875 = vmatprep.mubr.f32.mxu0 0.0
    %v876 = vand.u32 %v44, 4294901760
    %v877 = vsub.f32 %v44, %v876
    %v878 = vand.u32 %v877, 4294901760
    %879 = vmatmul.mubr.f32.gmra.mxu0 %v878
    %v880 = vpop.f32.mrf.mxu0
    %v881 = vadd.f32 %v683, %v880
    %v882 = vpop.f32.mrf.mxu0
    %883 = vmatprep.mubr.f32.mxu0 0.0
    %v884 = vand.u32 %v45, 4294901760
    %v885 = vsub.f32 %v45, %v884
    %v886 = vand.u32 %v885, 4294901760
    %887 = vmatmul.mubr.f32.gmra.mxu0 %v886
    %v888 = vpop.f32.mrf.mxu0
    %v889 = vadd.f32 %v690, %v888
    %v890 = vpop.f32.mrf.mxu0
    %891 = vmatprep.mubr.f32.mxu0 0.0
    %v892 = vand.u32 %v46, 4294901760
    %v893 = vsub.f32 %v46, %v892
    %v894 = vand.u32 %v893, 4294901760
    %895 = vmatmul.mubr.f32.gmra.mxu0 %v894
    %v896 = vpop.f32.mrf.mxu0
    %v897 = vadd.f32 %v697, %v896
    %v898 = vpop.f32.mrf.mxu0
    %899 = vmatprep.mubr.f32.mxu0 0.0
    %v900 = vand.u32 %v47, 4294901760
    %v901 = vsub.f32 %v47, %v900
    %v902 = vand.u32 %v901, 4294901760
    %903 = vmatmul.mubr.f32.gmra.mxu0 %v902
    %v904 = vpop.f32.mrf.mxu0
    %v905 = vadd.f32 %v704, %v904
    %v906 = vpop.f32.mrf.mxu0
    %907 = vmatprep.mubr.f32.mxu0 0.0
    %v908 = vand.u32 %v48, 4294901760
    %v909 = vsub.f32 %v48, %v908
    %v910 = vand.u32 %v909, 4294901760
    %911 = vmatmul.mubr.f32.gmra.mxu0 %v910
    %v912 = vpop.f32.mrf.mxu0
    %v913 = vadd.f32 %v711, %v912
    %v914 = vpop.f32.mrf.mxu0
    %915 = vmatprep.mubr.f32.mxu0 0.0
    %v916 = vand.u32 %v49, 4294901760
    %v917 = vsub.f32 %v49, %v916
    %v918 = vand.u32 %v917, 4294901760
    %919 = vmatmul.mubr.f32.gmra.mxu0 %v918
    %v920 = vpop.f32.mrf.mxu0
    %v921 = vadd.f32 %v718, %v920
    %v922 = vpop.f32.mrf.mxu0
    %923 = vmatprep.mubr.f32.mxu0 0.0
    %v924 = vand.u32 %v50, 4294901760
    %v925 = vsub.f32 %v50, %v924
    %v926 = vand.u32 %v925, 4294901760
    %927 = vmatmul.mubr.f32.gmra.mxu0 %v926
    %v928 = vpop.f32.mrf.mxu0
    %v929 = vadd.f32 %v725, %v928
    %v930 = vpop.f32.mrf.mxu0
    %931 = vmatprep.mubr.f32.mxu0 0.0
    %v932 = vand.u32 %v51, 4294901760
    %v933 = vsub.f32 %v51, %v932
    %v934 = vand.u32 %v933, 4294901760
    %935 = vmatmul.mubr.f32.gmra.mxu0 %v934
    %v936 = vpop.f32.mrf.mxu0
    %v937 = vadd.f32 %v732, %v936
    %v938 = vpop.f32.mrf.mxu0
    %939 = vmatprep.mubr.f32.mxu0 0.0
    %v940 = vand.u32 %v52, 4294901760
    %v941 = vsub.f32 %v52, %v940
    %v942 = vand.u32 %v941, 4294901760
    %943 = vmatmul.mubr.f32.gmra.mxu0 %v942
    %v944 = vpop.f32.mrf.mxu0
    %v945 = vadd.f32 %v739, %v944
    %v946 = vpop.f32.mrf.mxu0
    %947 = vmatprep.mubr.f32.mxu0 0.0
    %v948 = vand.u32 %v53, 4294901760
    %v949 = vsub.f32 %v53, %v948
    %v950 = vand.u32 %v949, 4294901760
    %951 = vmatmul.mubr.f32.gmra.mxu0 %v950
    %v952 = vpop.f32.mrf.mxu0
    %v953 = vadd.f32 %v746, %v952
    %v954 = vpop.f32.mrf.mxu0
    %955 = vmatprep.mubr.f32.mxu0 0.0
    %v956 = vand.u32 %v54, 4294901760
    %v957 = vsub.f32 %v54, %v956
    %v958 = vand.u32 %v957, 4294901760
    %959 = vmatmul.mubr.f32.gmra.mxu0 %v958
    %v960 = vpop.f32.mrf.mxu0
    %v961 = vadd.f32 %v753, %v960
    %v962 = vpop.f32.mrf.mxu0
    %963 = vmatprep.mubr.f32.mxu0 0.0
    %v964 = vand.u32 %v55, 4294901760
    %v965 = vsub.f32 %v55, %v964
    %v966 = vand.u32 %v965, 4294901760
    %967 = vmatmul.mubr.f32.gmra.mxu0 %v966
    %v968 = vpop.f32.mrf.mxu0
    %v969 = vadd.f32 %v760, %v968
    %v970 = vpop.f32.mrf.mxu0
    %971 = vdwg.mxu0
    %972 = vmatprep.subr.mxu0 0.0
    %v973 = vand.u32 %v71, 4294901760
    %v974 = vsub.f32 %v71, %v973
    %v975 = vand.u32 %v974, 4294901760
    %976 = vmatpush1.msra.mxu0 %v975
    %977 = vmatprep.subr.mxu0 0.0
    %v978 = vand.u32 %v70, 4294901760
    %v979 = vsub.f32 %v70, %v978
    %v980 = vand.u32 %v979, 4294901760
    %981 = vmatpush1.msra.mxu0 %v980
    %982 = vmatprep.subr.mxu0 0.0
    %v983 = vand.u32 %v69, 4294901760
    %v984 = vsub.f32 %v69, %v983
    %v985 = vand.u32 %v984, 4294901760
    %986 = vmatpush1.msra.mxu0 %v985
    %987 = vmatprep.subr.mxu0 0.0
    %v988 = vand.u32 %v68, 4294901760
    %v989 = vsub.f32 %v68, %v988
    %v990 = vand.u32 %v989, 4294901760
    %991 = vmatpush1.msra.mxu0 %v990
    %992 = vmatprep.subr.mxu0 0.0
    %v993 = vand.u32 %v67, 4294901760
    %v994 = vsub.f32 %v67, %v993
    %v995 = vand.u32 %v994, 4294901760
    %996 = vmatpush1.msra.mxu0 %v995
    %997 = vmatprep.subr.mxu0 0.0
    %v998 = vand.u32 %v66, 4294901760
    %v999 = vsub.f32 %v66, %v998
    %v1000 = vand.u32 %v999, 4294901760
    %1001 = vmatpush1.msra.mxu0 %v1000
    %1002 = vmatprep.subr.mxu0 0.0
    %v1003 = vand.u32 %v65, 4294901760
    %v1004 = vsub.f32 %v65, %v1003
    %v1005 = vand.u32 %v1004, 4294901760
    %1006 = vmatpush1.msra.mxu0 %v1005
    %1007 = vmatprep.subr.mxu0 0.0
    %v1008 = vand.u32 %v64, 4294901760
    %v1009 = vsub.f32 %v64, %v1008
    %v1010 = vand.u32 %v1009, 4294901760
    %1011 = vmatpush1.msra.mxu0 %v1010
    %1012 = vmatprep.subr.mxu0 0.0
    %v1013 = vand.u32 %v63, 4294901760
    %v1014 = vsub.f32 %v63, %v1013
    %v1015 = vand.u32 %v1014, 4294901760
    %1016 = vmatpush1.msra.mxu0 %v1015
    %1017 = vmatprep.subr.mxu0 0.0
    %v1018 = vand.u32 %v62, 4294901760
    %v1019 = vsub.f32 %v62, %v1018
    %v1020 = vand.u32 %v1019, 4294901760
    %1021 = vmatpush1.msra.mxu0 %v1020
    %1022 = vmatprep.subr.mxu0 0.0
    %v1023 = vand.u32 %v61, 4294901760
    %v1024 = vsub.f32 %v61, %v1023
    %v1025 = vand.u32 %v1024, 4294901760
    %1026 = vmatpush1.msra.mxu0 %v1025
    %1027 = vmatprep.subr.mxu0 0.0
    %v1028 = vand.u32 %v60, 4294901760
    %v1029 = vsub.f32 %v60, %v1028
    %v1030 = vand.u32 %v1029, 4294901760
    %1031 = vmatpush1.msra.mxu0 %v1030
    %1032 = vmatprep.subr.mxu0 0.0
    %v1033 = vand.u32 %v59, 4294901760
    %v1034 = vsub.f32 %v59, %v1033
    %v1035 = vand.u32 %v1034, 4294901760
    %1036 = vmatpush1.msra.mxu0 %v1035
    %1037 = vmatprep.subr.mxu0 0.0
    %v1038 = vand.u32 %v58, 4294901760
    %v1039 = vsub.f32 %v58, %v1038
    %v1040 = vand.u32 %v1039, 4294901760
    %1041 = vmatpush1.msra.mxu0 %v1040
    %1042 = vmatprep.subr.mxu0 0.0
    %v1043 = vand.u32 %v57, 4294901760
    %v1044 = vsub.f32 %v57, %v1043
    %v1045 = vand.u32 %v1044, 4294901760
    %1046 = vmatpush1.msra.mxu0 %v1045
    %1047 = vmatprep.subr.mxu0 0.0
    %v1048 = vand.u32 %v56, 4294901760
    %v1049 = vsub.f32 %v56, %v1048
    %v1050 = vand.u32 %v1049, 4294901760
    %1051 = vmatpush1.msra.mxu0 %v1050
    %1052 = vmatprep.subr.mxu0 0.0
    %1053 = vmatpush2.msra.mxu0 0.0
    %1054 = vmatprep.subr.mxu0 0.0
    %1055 = vmatpush2.msra.mxu0 0.0
    %1056 = vmatprep.subr.mxu0 0.0
    %1057 = vmatpush2.msra.mxu0 0.0
    %1058 = vmatprep.subr.mxu0 0.0
    %1059 = vmatpush2.msra.mxu0 0.0
    %1060 = vmatprep.subr.mxu0 0.0
    %1061 = vmatpush2.msra.mxu0 0.0
    %1062 = vmatprep.subr.mxu0 0.0
    %1063 = vmatpush2.msra.mxu0 0.0
    %1064 = vmatprep.subr.mxu0 0.0
    %1065 = vmatpush2.msra.mxu0 0.0
    %1066 = vmatprep.subr.mxu0 0.0
    %1067 = vmatpush2.msra.mxu0 0.0
    %1068 = vmatprep.subr.mxu0 0.0
    %1069 = vmatpush2.msra.mxu0 0.0
    %1070 = vmatprep.subr.mxu0 0.0
    %1071 = vmatpush2.msra.mxu0 0.0
    %1072 = vmatprep.subr.mxu0 0.0
    %1073 = vmatpush2.msra.mxu0 0.0
    %1074 = vmatprep.subr.mxu0 0.0
    %1075 = vmatpush2.msra.mxu0 0.0
    %1076 = vmatprep.subr.mxu0 0.0
    %1077 = vmatpush2.msra.mxu0 0.0
    %1078 = vmatprep.subr.mxu0 0.0
    %1079 = vmatpush2.msra.mxu0 0.0
    %1080 = vmatprep.subr.mxu0 0.0
    %1081 = vmatpush2.msra.mxu0 0.0
    %1082 = vmatprep.subr.mxu0 0.0
    %1083 = vmatpush2.msra.mxu0 0.0
    %1084 = vmatprep.mubr.f32.mxu0 0.0
    %v1085 = vand.u32 %v40, 4294901760
    %1086 = vmatmul.mubr.f32.gmra.mxu0 %v1085
    %v1087 = vpop.f32.mrf.mxu0
    %v1088 = vadd.f32 %v849, %v1087
    %v1089 = vpop.f32.mrf.mxu0
    %1090 = vmatprep.mubr.f32.mxu0 0.0
    %v1091 = vand.u32 %v41, 4294901760
    %1092 = vmatmul.mubr.f32.gmra.mxu0 %v1091
    %v1093 = vpop.f32.mrf.mxu0
    %v1094 = vadd.f32 %v857, %v1093
    %v1095 = vpop.f32.mrf.mxu0
    %1096 = vmatprep.mubr.f32.mxu0 0.0
    %v1097 = vand.u32 %v42, 4294901760
    %1098 = vmatmul.mubr.f32.gmra.mxu0 %v1097
    %v1099 = vpop.f32.mrf.mxu0
    %v1100 = vadd.f32 %v865, %v1099
    %v1101 = vpop.f32.mrf.mxu0
    %1102 = vmatprep.mubr.f32.mxu0 0.0
    %v1103 = vand.u32 %v43, 4294901760
    %1104 = vmatmul.mubr.f32.gmra.mxu0 %v1103
    %v1105 = vpop.f32.mrf.mxu0
    %v1106 = vadd.f32 %v873, %v1105
    %v1107 = vpop.f32.mrf.mxu0
    %1108 = vmatprep.mubr.f32.mxu0 0.0
    %v1109 = vand.u32 %v44, 4294901760
    %1110 = vmatmul.mubr.f32.gmra.mxu0 %v1109
    %v1111 = vpop.f32.mrf.mxu0
    %v1112 = vadd.f32 %v881, %v1111
    %v1113 = vpop.f32.mrf.mxu0
    %1114 = vmatprep.mubr.f32.mxu0 0.0
    %v1115 = vand.u32 %v45, 4294901760
    %1116 = vmatmul.mubr.f32.gmra.mxu0 %v1115
    %v1117 = vpop.f32.mrf.mxu0
    %v1118 = vadd.f32 %v889, %v1117
    %v1119 = vpop.f32.mrf.mxu0
    %1120 = vmatprep.mubr.f32.mxu0 0.0
    %v1121 = vand.u32 %v46, 4294901760
    %1122 = vmatmul.mubr.f32.gmra.mxu0 %v1121
    %v1123 = vpop.f32.mrf.mxu0
    %v1124 = vadd.f32 %v897, %v1123
    %v1125 = vpop.f32.mrf.mxu0
    %1126 = vmatprep.mubr.f32.mxu0 0.0
    %v1127 = vand.u32 %v47, 4294901760
    %1128 = vmatmul.mubr.f32.gmra.mxu0 %v1127
    %v1129 = vpop.f32.mrf.mxu0
    %v1130 = vadd.f32 %v905, %v1129
    %v1131 = vpop.f32.mrf.mxu0
    %1132 = vmatprep.mubr.f32.mxu0 0.0
    %v1133 = vand.u32 %v48, 4294901760
    %1134 = vmatmul.mubr.f32.gmra.mxu0 %v1133
    %v1135 = vpop.f32.mrf.mxu0
    %v1136 = vadd.f32 %v913, %v1135
    %v1137 = vpop.f32.mrf.mxu0
    %1138 = vmatprep.mubr.f32.mxu0 0.0
    %v1139 = vand.u32 %v49, 4294901760
    %1140 = vmatmul.mubr.f32.gmra.mxu0 %v1139
    %v1141 = vpop.f32.mrf.mxu0
    %v1142 = vadd.f32 %v921, %v1141
    %v1143 = vpop.f32.mrf.mxu0
    %1144 = vmatprep.mubr.f32.mxu0 0.0
    %v1145 = vand.u32 %v50, 4294901760
    %1146 = vmatmul.mubr.f32.gmra.mxu0 %v1145
    %v1147 = vpop.f32.mrf.mxu0
    %v1148 = vadd.f32 %v929, %v1147
    %v1149 = vpop.f32.mrf.mxu0
    %1150 = vmatprep.mubr.f32.mxu0 0.0
    %v1151 = vand.u32 %v51, 4294901760
    %1152 = vmatmul.mubr.f32.gmra.mxu0 %v1151
    %v1153 = vpop.f32.mrf.mxu0
    %v1154 = vadd.f32 %v937, %v1153
    %v1155 = vpop.f32.mrf.mxu0
    %1156 = vmatprep.mubr.f32.mxu0 0.0
    %v1157 = vand.u32 %v52, 4294901760
    %1158 = vmatmul.mubr.f32.gmra.mxu0 %v1157
    %v1159 = vpop.f32.mrf.mxu0
    %v1160 = vadd.f32 %v945, %v1159
    %v1161 = vpop.f32.mrf.mxu0
    %1162 = vmatprep.mubr.f32.mxu0 0.0
    %v1163 = vand.u32 %v53, 4294901760
    %1164 = vmatmul.mubr.f32.gmra.mxu0 %v1163
    %v1165 = vpop.f32.mrf.mxu0
    %v1166 = vadd.f32 %v953, %v1165
    %v1167 = vpop.f32.mrf.mxu0
    %1168 = vmatprep.mubr.f32.mxu0 0.0
    %v1169 = vand.u32 %v54, 4294901760
    %1170 = vmatmul.mubr.f32.gmra.mxu0 %v1169
    %v1171 = vpop.f32.mrf.mxu0
    %v1172 = vadd.f32 %v961, %v1171
    %v1173 = vpop.f32.mrf.mxu0
    %1174 = vmatprep.mubr.f32.mxu0 0.0
    %v1175 = vand.u32 %v55, 4294901760
    %1176 = vmatmul.mubr.f32.gmra.mxu0 %v1175
    %v1177 = vpop.f32.mrf.mxu0
    %v1178 = vadd.f32 %v969, %v1177
    %v1179 = vpop.f32.mrf.mxu0
    %1180 = vdwg.mxu0
    %1181 = vmatprep.subr.mxu0 0.0
    %v1182 = vand.u32 %v71, 4294901760
    %1183 = vmatpush1.msra.mxu0 %v1182
    %1184 = vmatprep.subr.mxu0 0.0
    %v1185 = vand.u32 %v70, 4294901760
    %1186 = vmatpush1.msra.mxu0 %v1185
    %1187 = vmatprep.subr.mxu0 0.0
    %v1188 = vand.u32 %v69, 4294901760
    %1189 = vmatpush1.msra.mxu0 %v1188
    %1190 = vmatprep.subr.mxu0 0.0
    %v1191 = vand.u32 %v68, 4294901760
    %1192 = vmatpush1.msra.mxu0 %v1191
    %1193 = vmatprep.subr.mxu0 0.0
    %v1194 = vand.u32 %v67, 4294901760
    %1195 = vmatpush1.msra.mxu0 %v1194
    %1196 = vmatprep.subr.mxu0 0.0
    %v1197 = vand.u32 %v66, 4294901760
    %1198 = vmatpush1.msra.mxu0 %v1197
    %1199 = vmatprep.subr.mxu0 0.0
    %v1200 = vand.u32 %v65, 4294901760
    %1201 = vmatpush1.msra.mxu0 %v1200
    %1202 = vmatprep.subr.mxu0 0.0
    %v1203 = vand.u32 %v64, 4294901760
    %1204 = vmatpush1.msra.mxu0 %v1203
    %1205 = vmatprep.subr.mxu0 0.0
    %v1206 = vand.u32 %v63, 4294901760
    %1207 = vmatpush1.msra.mxu0 %v1206
    %1208 = vmatprep.subr.mxu0 0.0
    %v1209 = vand.u32 %v62, 4294901760
    %1210 = vmatpush1.msra.mxu0 %v1209
    %1211 = vmatprep.subr.mxu0 0.0
    %v1212 = vand.u32 %v61, 4294901760
    %1213 = vmatpush1.msra.mxu0 %v1212
    %1214 = vmatprep.subr.mxu0 0.0
    %v1215 = vand.u32 %v60, 4294901760
    %1216 = vmatpush1.msra.mxu0 %v1215
    %1217 = vmatprep.subr.mxu0 0.0
    %v1218 = vand.u32 %v59, 4294901760
    %1219 = vmatpush1.msra.mxu0 %v1218
    %1220 = vmatprep.subr.mxu0 0.0
    %v1221 = vand.u32 %v58, 4294901760
    %1222 = vmatpush1.msra.mxu0 %v1221
    %1223 = vmatprep.subr.mxu0 0.0
    %v1224 = vand.u32 %v57, 4294901760
    %1225 = vmatpush1.msra.mxu0 %v1224
    %1226 = vmatprep.subr.mxu0 0.0
    %v1227 = vand.u32 %v56, 4294901760
    %1228 = vmatpush1.msra.mxu0 %v1227
    %1229 = vmatprep.subr.mxu0 0.0
    %1230 = vmatpush2.msra.mxu0 0.0
    %1231 = vmatprep.subr.mxu0 0.0
    %1232 = vmatpush2.msra.mxu0 0.0
    %1233 = vmatprep.subr.mxu0 0.0
    %1234 = vmatpush2.msra.mxu0 0.0
    %1235 = vmatprep.subr.mxu0 0.0
    %1236 = vmatpush2.msra.mxu0 0.0
    %1237 = vmatprep.subr.mxu0 0.0
    %1238 = vmatpush2.msra.mxu0 0.0
    %1239 = vmatprep.subr.mxu0 0.0
    %1240 = vmatpush2.msra.mxu0 0.0
    %1241 = vmatprep.subr.mxu0 0.0
    %1242 = vmatpush2.msra.mxu0 0.0
    %1243 = vmatprep.subr.mxu0 0.0
    %1244 = vmatpush2.msra.mxu0 0.0
    %1245 = vmatprep.subr.mxu0 0.0
    %1246 = vmatpush2.msra.mxu0 0.0
    %1247 = vmatprep.subr.mxu0 0.0
    %1248 = vmatpush2.msra.mxu0 0.0
    %1249 = vmatprep.subr.mxu0 0.0
    %1250 = vmatpush2.msra.mxu0 0.0
    %1251 = vmatprep.subr.mxu0 0.0
    %1252 = vmatpush2.msra.mxu0 0.0
    %1253 = vmatprep.subr.mxu0 0.0
    %1254 = vmatpush2.msra.mxu0 0.0
    %1255 = vmatprep.subr.mxu0 0.0
    %1256 = vmatpush2.msra.mxu0 0.0
    %1257 = vmatprep.subr.mxu0 0.0
    %1258 = vmatpush2.msra.mxu0 0.0
    %1259 = vmatprep.subr.mxu0 0.0
    %1260 = vmatpush2.msra.mxu0 0.0
    %1261 = vmatprep.mubr.f32.mxu0 0.0
    %v1262 = vand.u32 %v40, 4294901760
    %1263 = vmatmul.mubr.f32.gmra.mxu0 %v1262
    %v1264 = vpop.f32.mrf.mxu0
    %v1265 = vadd.f32 %v1088, %v1264
    %v1266 = vpop.f32.mrf.mxu0
    %1267 = vmatprep.mubr.f32.mxu0 0.0
    %v1268 = vand.u32 %v41, 4294901760
    %1269 = vmatmul.mubr.f32.gmra.mxu0 %v1268
    %v1270 = vpop.f32.mrf.mxu0
    %v1271 = vadd.f32 %v1094, %v1270
    %v1272 = vpop.f32.mrf.mxu0
    %1273 = vmatprep.mubr.f32.mxu0 0.0
    %v1274 = vand.u32 %v42, 4294901760
    %1275 = vmatmul.mubr.f32.gmra.mxu0 %v1274
    %v1276 = vpop.f32.mrf.mxu0
    %v1277 = vadd.f32 %v1100, %v1276
    %v1278 = vpop.f32.mrf.mxu0
    %1279 = vmatprep.mubr.f32.mxu0 0.0
    %v1280 = vand.u32 %v43, 4294901760
    %1281 = vmatmul.mubr.f32.gmra.mxu0 %v1280
    %v1282 = vpop.f32.mrf.mxu0
    %v1283 = vadd.f32 %v1106, %v1282
    %v1284 = vpop.f32.mrf.mxu0
    %1285 = vmatprep.mubr.f32.mxu0 0.0
    %v1286 = vand.u32 %v44, 4294901760
    %1287 = vmatmul.mubr.f32.gmra.mxu0 %v1286
    %v1288 = vpop.f32.mrf.mxu0
    %v1289 = vadd.f32 %v1112, %v1288
    %v1290 = vpop.f32.mrf.mxu0
    %1291 = vmatprep.mubr.f32.mxu0 0.0
    %v1292 = vand.u32 %v45, 4294901760
    %1293 = vmatmul.mubr.f32.gmra.mxu0 %v1292
    %v1294 = vpop.f32.mrf.mxu0
    %v1295 = vadd.f32 %v1118, %v1294
    %v1296 = vpop.f32.mrf.mxu0
    %1297 = vmatprep.mubr.f32.mxu0 0.0
    %v1298 = vand.u32 %v46, 4294901760
    %1299 = vmatmul.mubr.f32.gmra.mxu0 %v1298
    %v1300 = vpop.f32.mrf.mxu0
    %v1301 = vadd.f32 %v1124, %v1300
    %v1302 = vpop.f32.mrf.mxu0
    %1303 = vmatprep.mubr.f32.mxu0 0.0
    %v1304 = vand.u32 %v47, 4294901760
    %1305 = vmatmul.mubr.f32.gmra.mxu0 %v1304
    %v1306 = vpop.f32.mrf.mxu0
    %v1307 = vadd.f32 %v1130, %v1306
    %v1308 = vpop.f32.mrf.mxu0
    %1309 = vmatprep.mubr.f32.mxu0 0.0
    %v1310 = vand.u32 %v48, 4294901760
    %1311 = vmatmul.mubr.f32.gmra.mxu0 %v1310
    %v1312 = vpop.f32.mrf.mxu0
    %v1313 = vadd.f32 %v1136, %v1312
    %v1314 = vpop.f32.mrf.mxu0
    %1315 = vmatprep.mubr.f32.mxu0 0.0
    %v1316 = vand.u32 %v49, 4294901760
    %1317 = vmatmul.mubr.f32.gmra.mxu0 %v1316
    %v1318 = vpop.f32.mrf.mxu0
    %v1319 = vadd.f32 %v1142, %v1318
    %v1320 = vpop.f32.mrf.mxu0
    %1321 = vmatprep.mubr.f32.mxu0 0.0
    %v1322 = vand.u32 %v50, 4294901760
    %1323 = vmatmul.mubr.f32.gmra.mxu0 %v1322
    %v1324 = vpop.f32.mrf.mxu0
    %v1325 = vadd.f32 %v1148, %v1324
    %v1326 = vpop.f32.mrf.mxu0
    %1327 = vmatprep.mubr.f32.mxu0 0.0
    %v1328 = vand.u32 %v51, 4294901760
    %1329 = vmatmul.mubr.f32.gmra.mxu0 %v1328
    %v1330 = vpop.f32.mrf.mxu0
    %v1331 = vadd.f32 %v1154, %v1330
    %v1332 = vpop.f32.mrf.mxu0
    %1333 = vmatprep.mubr.f32.mxu0 0.0
    %v1334 = vand.u32 %v52, 4294901760
    %1335 = vmatmul.mubr.f32.gmra.mxu0 %v1334
    %v1336 = vpop.f32.mrf.mxu0
    %v1337 = vadd.f32 %v1160, %v1336
    %v1338 = vpop.f32.mrf.mxu0
    %1339 = vmatprep.mubr.f32.mxu0 0.0
    %v1340 = vand.u32 %v53, 4294901760
    %1341 = vmatmul.mubr.f32.gmra.mxu0 %v1340
    %v1342 = vpop.f32.mrf.mxu0
    %v1343 = vadd.f32 %v1166, %v1342
    %v1344 = vpop.f32.mrf.mxu0
    %1345 = vmatprep.mubr.f32.mxu0 0.0
    %v1346 = vand.u32 %v54, 4294901760
    %1347 = vmatmul.mubr.f32.gmra.mxu0 %v1346
    %v1348 = vpop.f32.mrf.mxu0
    %v1349 = vadd.f32 %v1172, %v1348
    %v1350 = vpop.f32.mrf.mxu0
    %1351 = vmatprep.mubr.f32.mxu0 0.0
    %v1352 = vand.u32 %v55, 4294901760
    %1353 = vmatmul.mubr.f32.gmra.mxu0 %v1352
    %v1354 = vpop.f32.mrf.mxu0
    %v1355 = vadd.f32 %v1178, %v1354
    %v1356 = vpop.f32.mrf.mxu0
    %1357 = vdwg.mxu0
    %v1358 = vpack.c.bf16 %v1271, %v1265
    %v1359 = vpack.c.bf16 %v1283, %v1277
    %v1360 = vpack.c.bf16 %v1295, %v1289
    %v1361 = vpack.c.bf16 %v1307, %v1301
    %v1362 = vpack.c.bf16 %v1319, %v1313
    %v1363 = vpack.c.bf16 %v1331, %v1325
    %v1364 = vpack.c.bf16 %v1343, %v1337
    %v1365 = vpack.c.bf16 %v1355, %v1349
    %v1374 = vunpack.c.l.b16 %v1358
    %v1375 = vunpack.c.h.b16 %v1358
    %v1376 = vunpack.c.l.b16 %v1359
    %v1377 = vunpack.c.h.b16 %v1359
    %v1378 = vunpack.c.l.b16 %v1360
    %v1379 = vunpack.c.h.b16 %v1360
    %v1380 = vunpack.c.l.b16 %v1361
    %v1381 = vunpack.c.h.b16 %v1361
    %v1382 = vunpack.c.l.b16 %v1362
    %v1383 = vunpack.c.h.b16 %v1362
    %v1384 = vunpack.c.l.b16 %v1363
    %v1385 = vunpack.c.h.b16 %v1363
    %v1386 = vunpack.c.l.b16 %v1364
    %v1387 = vunpack.c.h.b16 %v1364
    %v1388 = vunpack.c.l.b16 %v1365
    %v1389 = vunpack.c.h.b16 %v1365
    %v1390 = vpack.c.b16 %v1374, %v1374
    %v1391 = vpack.c.b16 %v1375, %v1375
    %v1392 = vpack.c.b16 %v1376, %v1376
    %v1393 = vpack.c.b16 %v1377, %v1377
    %v1394 = vpack.c.b16 %v1378, %v1378
    %v1395 = vpack.c.b16 %v1379, %v1379
    %v1396 = vpack.c.b16 %v1380, %v1380
    %v1397 = vpack.c.b16 %v1381, %v1381
    %v1398 = vpack.c.b16 %v1382, %v1382
    %v1399 = vpack.c.b16 %v1383, %v1383
    %v1400 = vpack.c.b16 %v1384, %v1384
    %v1401 = vpack.c.b16 %v1385, %v1385
    %v1402 = vpack.c.b16 %v1386, %v1386
    %v1403 = vpack.c.b16 %v1387, %v1387
    %v1404 = vpack.c.b16 %v1388, %v1388
    %v1405 = vpack.c.b16 %v1389, %v1389
    %1422 = vst [vmem:[#allocation7] sm:$0xf] %v1390
    %1423 = vst [vmem:[#allocation7 + $0x4] sm:$0xf] %v1391
    %1424 = vst [vmem:[#allocation7 + $0x8] sm:$0xf] %v1392
    %1425 = vst [vmem:[#allocation7 + $0xc] sm:$0xf] %v1393
    %1426 = vst [vmem:[#allocation7 + $0x10] sm:$0xf] %v1394
    %1427 = vst [vmem:[#allocation7 + $0x14] sm:$0xf] %v1395
    %1428 = vst [vmem:[#allocation7 + $0x18] sm:$0xf] %v1396
    %1429 = vst [vmem:[#allocation7 + $0x1c] sm:$0xf] %v1397
    %1430 = vst [vmem:[#allocation7 + $0x20] sm:$0xf] %v1398
    %1431 = vst [vmem:[#allocation7 + $0x24] sm:$0xf] %v1399
    %1432 = vst [vmem:[#allocation7 + $0x28] sm:$0xf] %v1400
    %1433 = vst [vmem:[#allocation7 + $0x2c] sm:$0xf] %v1401
    %1434 = vst [vmem:[#allocation7 + $0x30] sm:$0xf] %v1402
    %1435 = vst [vmem:[#allocation7 + $0x34] sm:$0xf] %v1403
    %1436 = vst [vmem:[#allocation7 + $0x38] sm:$0xf] %v1404
    %1437 = vst [vmem:[#allocation7 + $0x3c] sm:$0xf] %v1405
    // Predicated region
    $region18: #{tpu_custom_call.1} parent=1 // pred_check
      _
    $region19: #{tpu_custom_call.1} parent=1 // pred_check_branch
      %1439 = sbr.rel (0) target = $region21
    $region20: #{tpu_custom_call.1} parent=1 // pred_region
      %s1441 = ssub.s32 1024, 1024
      %1442 = vsyncadd [#allocation4], %s1441
      %s1443 = sshll.u32 [#allocation7], 4
      %s1444 = int_to_ptr.vmem [resolvable:$true] %s1443
      %1449 = dma.vmem_to_hbm [thread:$0]  %s1444, 1024, %s2, [#allocation4], 64, 64, 4
    $region21: #{tpu_custom_call.1} parent=1 // pred_fallthru
      _
    // Predicated region
    $region22: #{tpu_custom_call.1} parent=1 // pred_check
      _
    $region23: #{tpu_custom_call.1} parent=1 // pred_check_branch
      %1451 = sbr.rel (0) target = $region25
    $region24: #{tpu_custom_call.1} parent=1 // pred_region
      %1452 = dma.done [#allocation4], 1024
    $region25: #{tpu_custom_call.1} parent=1 // pred_fallthru
      _
    %1453 = vsyncpa [#allocation3], 1
    %1454 = vsyncpa [#allocation6], 1
    %1455 = vsyncpa [#allocation4], 1

</llo_original>
